<compile_context>
chip_gen: v6e
topology: v6e:2x2x1
jax: 0.10.0
libtpu: 0.0.40
codegen_flags: <defaults>
</compile_context>

<pallas_src>
import jax
import jax.numpy as jnp
from jax.experimental import pallas as pl
from jax.experimental.pallas import tpu as pltpu

_LANE = 128
_SUBLANE = 8


def _normalize_kernel(x_ref, sb_ref, o_ref):
    """o = x * scale + bias -- one FMA per element, cast only at the store.

    x_ref : (TN, TL) activation block.
    sb_ref: (2, TL) fused constants; row 0 = 1/std, row 1 = -mean/std.
    """
    scale = sb_ref[0:1, :]
    bias = sb_ref[1:2, :]
    o_ref[...] = (x_ref[...] * scale + bias).astype(o_ref.dtype)


def _round_down(v, m):
    return (v // m) * m


def _sublane_granule(*dtypes):
    # Packed-sublane granule: 8 rows for 4-byte, 16 for 2-byte, 32 for 1-byte.
    return _SUBLANE * max(max(1, 4 // jnp.dtype(d).itemsize) for d in dtypes)


def _choose_tiles(n, l, in_bytes, out_bytes, granule, *, block_budget_bytes=2 << 20):
    """Pick (TN, TL): ~block_budget of combined in+out bytes per grid step, and
    >=2 grid steps whenever the problem is big enough to split."""
    bytes_per_elem = in_bytes + out_bytes

    if l % _LANE != 0:
        # Ragged lane count: full-extent lane block (exempt from the 128 rule);
        # never materialize a padded copy of the activations.
        tl = l
    else:
        tl = min(l, max(_LANE, _round_down(
            block_budget_bytes // (granule * bytes_per_elem), _LANE)))

    tn = max(1, block_budget_bytes // (tl * bytes_per_elem))
    if tn >= n:
        tn = n  # full batch dim (exempt from sublane alignment)
    else:
        tn = min(n, max(granule, _round_down(tn, granule)))

    # Guarantee >=2 pipeline steps (DMA/compute overlap, v7x megacore sharding)
    # whenever either axis can be split without breaking alignment.
    if pl.cdiv(n, tn) * pl.cdiv(l, tl) < 2:
        if n >= 2 * granule:
            tn = max(granule, _round_down(n // 2, granule))
        elif l % _LANE == 0 and l >= 2 * _LANE:
            tl = max(_LANE, _round_down(l // 2, _LANE))
    return tn, tl


def normalized_model_forward(x, mean, std, *, out_dtype=None, donate_input=False):
    """Forward of NormalizedModel: out = model((x - mean) / std).

    x: (N, C, H, W); mean/std: (C, 1, 1) (any shape with C elements works).
    out_dtype: pass jnp.bfloat16 when the wrapped model runs in bf16 -- the
      store is then half-width and this HBM-bound pass writes ~2x less.
    donate_input: set True only when out_dtype == x.dtype and the caller never
      reads the un-normalized x again (aliases output onto x's HBM buffer).
    """
    N, C, H, W = x.shape
    out_dtype = x.dtype if out_dtype is None else jnp.dtype(out_dtype)
    HW = H * W
    L = C * HW

    # (x - mean) / std  ==  x * scale + bias; fold per-channel constants into a
    # single (2, L) operand (one grid-invariant DMA stream instead of two).
    std_f = jnp.asarray(std, jnp.float32).reshape(C)
    mean_f = jnp.asarray(mean, jnp.float32).reshape(C)
    scale_c = 1.0 / std_f
    bias_c = -mean_f / std_f
    sb = jnp.concatenate(
        [jnp.broadcast_to(scale_c[:, None], (C, HW)).reshape(1, L),
         jnp.broadcast_to(bias_c[:, None], (C, HW)).reshape(1, L)],
        axis=0,
    )  # (2, L) float32

    # Lane-dense flat view: reshape only -- no padding, no trailing slice.
    x_flat = x.reshape(N, L)

    in_bytes = x.dtype.itemsize
    out_bytes = out_dtype.itemsize
    granule = _sublane_granule(x.dtype, out_dtype)
    TN, TL = _choose_tiles(N, L, in_bytes, out_bytes, granule)
    grid = (pl.cdiv(N, TN), pl.cdiv(L, TL))

    # VMEM: depth-2 buffers for input, output (own itemsizes) and the fused
    # constant, capped at 32 MiB (v7x has only 64 MiB VMEM per TensorCore).
    vmem_need = 2 * (TN * TL * (in_bytes + out_bytes) + 2 * TL * 4) + (2 << 20)
    vmem_limit = int(min(max(vmem_need, 8 << 20), 32 << 20))

    aliases = {}
    if donate_input and out_dtype == x.dtype:
        aliases = {0: 0}  # reuse x's HBM buffer for the output

    y_flat = pl.pallas_call(
        _normalize_kernel,
        out_shape=jax.ShapeDtypeStruct((N, L), out_dtype),
        grid_spec=pltpu.PrefetchScalarGridSpec(
            num_scalar_prefetch=0,
            grid=grid,
            in_specs=[
                pl.BlockSpec((TN, TL), lambda i, j: (i, j)),
                pl.BlockSpec((2, TL), lambda i, j: (0, j)),
            ],
            out_specs=pl.BlockSpec((TN, TL), lambda i, j: (i, j)),
        ),
        compiler_params=pltpu.CompilerParams(
            dimension_semantics=("parallel", "parallel"),
            vmem_limit_bytes=vmem_limit,
        ),
        input_output_aliases=aliases,
    )(x_flat, sb)

    x_norm = y_flat.reshape(N, C, H, W)

    # self.model(x) -- wrapped submodule is external; identity placeholder.
    # TODO(synk): fold scale/bias into the wrapped model's first layer and
    #             delete this kernel entirely (removes the HBM round-trip).
    out = x_norm
    return out


if __name__ == "__main__":
    key = jax.random.PRNGKey(0)

    # Small shapes consistent with the module: 3-channel image input (NCHW).
    N, C, H, W = 2, 3, 16, 16
    x = jax.random.uniform(key, (N, C, H, W), dtype=jnp.float32)

    # Deterministic "CIFAR-like" normalization parameters (shape (3, 1, 1)).
    mean = jnp.array([0.4914, 0.4822, 0.4465], dtype=jnp.float32).reshape(C, 1, 1)
    std = jnp.array([0.2471, 0.2435, 0.2616], dtype=jnp.float32).reshape(C, 1, 1)

    out = normalized_model_forward(x, mean, std)
    out = jax.block_until_ready(out)

    # Reference check against plain JAX broadcasting semantics.
    ref = (x - mean[None]) / std[None]
    assert out.shape == (N, C, H, W)
    assert jnp.allclose(out, ref, atol=1e-5, rtol=1e-5), "f32 mismatch vs reference"

    # bf16-output path (half-width stores for a bf16 downstream model).
    out_bf16 = jax.block_until_ready(
        normalized_model_forward(x, mean, std, out_dtype=jnp.bfloat16))
    assert out_bf16.dtype == jnp.bfloat16
    assert jnp.allclose(out_bf16.astype(jnp.float32), ref, atol=3e-2, rtol=3e-2), \
        "bf16 mismatch vs reference"

    print("KERNEL_OK")
</pallas_src>

<mosaic_0001>
module attributes {stable_mosaic.version = 11 : i64} {
  func.func @_normalize_kernel(%arg0: i32, %arg1: i32, %arg2: memref<2x384xf32, #tpu.memory_space<vmem>>, %arg3: memref<2x384xf32, #tpu.memory_space<vmem>>, %arg4: memref<2x384xf32, #tpu.memory_space<vmem>>) attributes {dimension_semantics = [#tpu.dimension_semantics<parallel>, #tpu.dimension_semantics<parallel>], iteration_bounds = array<i64: 1, 2>, scalar_prefetch = 0 : i64, scratch_operands = 0 : i64, tpu.core_type = #tpu.core_type<tc>, window_params = [{transform_indices = @transform_0, window_bounds = array<i64: 2, 384>}, {transform_indices = @transform_1, window_bounds = array<i64: 2, 384>}, {transform_indices = @transform_2, window_bounds = array<i64: 2, 384>}]} {
    %c0 = arith.constant 0 : index
    %c0_0 = arith.constant 0 : index
    %0 = vector.load %arg3[%c0, %c0_0] : memref<2x384xf32, #tpu.memory_space<vmem>>, vector<1x384xf32>
    %c1 = arith.constant 1 : index
    %c0_1 = arith.constant 0 : index
    %1 = vector.load %arg3[%c1, %c0_1] : memref<2x384xf32, #tpu.memory_space<vmem>>, vector<1x384xf32>
    %c0_2 = arith.constant 0 : index
    %c0_3 = arith.constant 0 : index
    %2 = vector.load %arg2[%c0_2, %c0_3] : memref<2x384xf32, #tpu.memory_space<vmem>>, vector<2x384xf32>
    %3 = vector.broadcast %0 : vector<1x384xf32> to vector<2x384xf32>
    %4 = arith.mulf %2, %3 : vector<2x384xf32>
    %5 = vector.broadcast %1 : vector<1x384xf32> to vector<2x384xf32>
    %6 = arith.addf %4, %5 : vector<2x384xf32>
    %c0_4 = arith.constant 0 : index
    %c0_5 = arith.constant 0 : index
    %7 = vector.load %arg4[%c0_4, %c0_5] : memref<2x384xf32, #tpu.memory_space<vmem>>, vector<2x384xf32>
    tpu.vector_store %arg4[%c0_4, %c0_5], %6 {strides = array<i32>} : memref<2x384xf32, #tpu.memory_space<vmem>>, vector<2x384xf32>,
    return
  }
  func.func @transform_0(%arg0: i32, %arg1: i32) -> (i32, i32) {
    %c0_i32 = arith.constant 0 : i32
    return %arg0, %arg1 : i32, i32
  }
  func.func @transform_1(%arg0: i32, %arg1: i32) -> (i32, i32) {
    %c0_i32 = arith.constant 0 : i32
    %c0_i32_0 = arith.constant 0 : i32
    return %c0_i32, %arg1 : i32, i32
  }
  func.func @transform_2(%arg0: i32, %arg1: i32) -> (i32, i32) {
    %c0_i32 = arith.constant 0 : i32
    return %arg0, %arg1 : i32, i32
  }
}

</mosaic_0001>

<llo_original>
// kernel: tpu_custom_call.1
$region0: #{tpu_custom_call.1}
  #allocation0 [shape = 'u32[]', space=smem, size = 0x4, offset = 0x4, fixed_abs, tag = 'smem constant byte address 0x4 - core index']
  #allocation1 [shape = 'u32[144,128]{1,0:T(1,128)}', space=vmem, size = 0x12000, scoped, tag = 'internal scratch']
  %s0 = inlined_call_operand.hbm [shape: f32[2,768], index: 0, kind: input, shape index: {}]
  %s1 = inlined_call_operand.hbm [shape: f32[2,768], index: 1, kind: input, shape index: {}]
  %s2 = inlined_call_operand.hbm [shape: f32[2,768], index: 2, kind: output, shape index: {}]
  %s3 = sld [smem:[#allocation0]]
  $region49: #{tpu_custom_call.1} parent=0
    _
  %s5 = ssub.s32 1, %s3
  %s6 = scalar_select 0, %s5, %s3
  $region1: #{tpu_custom_call.1} parent=0
    #allocation2 [shape = 'u8[6144]{0}', space=vmem, size = 0x1800, scoped, tag = 'input window, operand 0']
    #allocation3 [shape = 's32[2]{0}', space=sflag, size = 0x8, scoped, tag = 'scoped memory for tpu_custom_call.1']
    #allocation4 [shape = 's32[2]{0}', space=sflag, size = 0x8, scoped, tag = 'scoped memory for tpu_custom_call.1']
    #allocation5 [shape = 'u8[6144]{0}', space=vmem, size = 0x1800, scoped, tag = 'input window, operand 1']
    #allocation6 [shape = 's32[2]{0}', space=sflag, size = 0x8, scoped, tag = 'scoped memory for tpu_custom_call.1']
    #allocation7 [shape = 'u8[6144]{0}', space=vmem, size = 0x1800, scoped, tag = 'output window, operand 0']
    %7 = vsyncpa [#allocation3], 0
    %s8 = scalar_lea.sflag [#allocation3], 1
    %9 = vsyncpa %s8, 0
    %10 = vsyncpa [#allocation6], 0
    %s11 = scalar_lea.sflag [#allocation6], 1
    %12 = vsyncpa %s11, 0
    %13 = vsyncpa [#allocation4], 0
    %s14 = scalar_lea.sflag [#allocation4], 1
    %15 = vsyncpa %s14, 0
    loop: start=0, step=1, limit=4
    $region2: #{tpu_custom_call.1} parent=1 // loop_pre_header
      _
    $region3: #{tpu_custom_call.1} parent=1 // loop_header
      %s17 = sphi 0, %s21
      %p18 = scmp.ge.s32.totalorder %s17, 4
      %s24 = sphi 0, %s36
      %s25 = sphi 0, %s32
      %s26 = sphi 0, %s24
      %s27 = sphi 0, %s25
      %s28 = sphi 0, %s26
      %s29 = sphi 0, %s27
      %s41 = sphi 0, %s43
      %s44 = sphi 0, %s41
      %s45 = sphi 0, %s44
      %s61 = sphi 0, %s45
      %s67 = sphi 0, %s69
      %s70 = sphi 0, %s67
      %s71 = sphi 0, %s70
      %s87 = sphi 0, %s71
      %s95 = sphi 0, %s97
      %s98 = sphi 0, %s95
      %s99 = sphi 0, %s98
      %s115 = sphi 0, %s99
    $region4: #{tpu_custom_call.1} parent=1 // loop_header_branch
      %20 = sbr.rel (%p18) target = $region8
    $region5: #{tpu_custom_call.1} parent=1 // loop_body
      %s22 = ssub.s32 %s17, 1
      %s23 = ssub.s32 %s17, 2
      %s30 = sadd.s32 1, %s25
      %p31 = scmp.ge.s32.totalorder %s30, 2
      %s32 = scalar_select %p31, 0, %s30
      %s33 = sadd.s32 1, %s24
      %s34 = scalar_select %p31, %s33, %s24
      %p35 = scmp.ge.s32.totalorder %s34, 1
      %s36 = scalar_select %p35, 0, %s34
      %s37 = ssub.s32 %s24, %s36
      %s38 = ssub.s32 %s25, %s32
      %s39 = sor.u32 %s37, %s38
      %p40 = scmp.eq.s32.totalorder %s39, 0
      %s42 = sadd.s32 %s41, 1
      %s43 = scalar_select %p40, %s41, %s42
      %p46 = pneg %p40
      %p47 = scmp.eq.s32.totalorder %s17, 1
      %p48 = por %p46, %p47
      %p49 = scmp.ne.s32.totalorder %s41, %s44
      %p50 = scmp.eq.s32.totalorder %s17, 0
      %p51 = por %p49, %p50
      %p52 = scmp.ne.s32.totalorder %s41, %s44
      %p53 = scmp.eq.s32.totalorder %s22, 1
      %p54 = por %p52, %p53
      %p55 = scmp.ne.s32.totalorder %s44, %s45
      %p56 = scmp.eq.s32.totalorder %s22, 0
      %p57 = por %p55, %p56
      %p58 = scmp.ne.s32.totalorder %s44, %s45
      %p59 = scmp.eq.s32.totalorder %s23, 1
      %p60 = por %p58, %p59
      %p62 = scmp.ne.s32.totalorder %s45, %s61
      %p63 = scmp.eq.s32.totalorder %s23, 0
      %p64 = por %p62, %p63
      %s65 = ssub.s32 %s25, %s32
      %p66 = scmp.eq.s32.totalorder %s65, 0
      %s68 = sadd.s32 %s67, 1
      %s69 = scalar_select %p66, %s67, %s68
      %p72 = pneg %p66
      %p73 = scmp.eq.s32.totalorder %s17, 1
      %p74 = por %p72, %p73
      %p75 = scmp.ne.s32.totalorder %s67, %s70
      %p76 = scmp.eq.s32.totalorder %s17, 0
      %p77 = por %p75, %p76
      %p78 = scmp.ne.s32.totalorder %s67, %s70
      %p79 = scmp.eq.s32.totalorder %s22, 1
      %p80 = por %p78, %p79
      %p81 = scmp.ne.s32.totalorder %s70, %s71
      %p82 = scmp.eq.s32.totalorder %s22, 0
      %p83 = por %p81, %p82
      %p84 = scmp.ne.s32.totalorder %s70, %s71
      %p85 = scmp.eq.s32.totalorder %s23, 1
      %p86 = por %p84, %p85
      %p88 = scmp.ne.s32.totalorder %s71, %s87
      %p89 = scmp.eq.s32.totalorder %s23, 0
      %p90 = por %p88, %p89
      %s91 = ssub.s32 %s24, %s36
      %s92 = ssub.s32 %s25, %s32
      %s93 = sor.u32 %s91, %s92
      %p94 = scmp.eq.s32.totalorder %s93, 0
      %s96 = sadd.s32 %s95, 1
      %s97 = scalar_select %p94, %s95, %s96
      %p100 = pneg %p94
      %p101 = scmp.eq.s32.totalorder %s17, 1
      %p102 = por %p100, %p101
      %p103 = scmp.ne.s32.totalorder %s95, %s98
      %p104 = scmp.eq.s32.totalorder %s17, 0
      %p105 = por %p103, %p104
      %p106 = scmp.ne.s32.totalorder %s95, %s98
      %p107 = scmp.eq.s32.totalorder %s22, 1
      %p108 = por %p106, %p107
      %p109 = scmp.ne.s32.totalorder %s98, %s99
      %p110 = scmp.eq.s32.totalorder %s22, 0
      %p111 = por %p109, %p110
      %p112 = scmp.ne.s32.totalorder %s98, %s99
      %p113 = scmp.eq.s32.totalorder %s23, 1
      %p114 = por %p112, %p113
      %p116 = scmp.ne.s32.totalorder %s99, %s115
      %p117 = scmp.eq.s32.totalorder %s23, 0
      %p118 = por %p116, %p117
      %p119 = scmp.le.s32.totalorder 1, %s17
      %p120 = scmp.lt.s32.totalorder %s17, 3
      %p121 = pnand %p119, %p120
      %p122 = pneg %p121
      // Predicated region
      $region9: #{tpu_custom_call.1} parent=5 // pred_check
        _
      $region10: #{tpu_custom_call.1} parent=5 // pred_check_branch
        %124 = sbr.rel (%p121) target = $region12
      $region11: #{tpu_custom_call.1} parent=5 // pred_region
        %s125 = ssub.s32 %s17, 1
      $region12: #{tpu_custom_call.1} parent=5 // pred_fallthru
        _
      %p126 = scmp.lt.s32.totalorder %s17, 2
      // Predicated region
      $region13: #{tpu_custom_call.1} parent=5 // pred_check
        %p127 = pneg %p126
      $region14: #{tpu_custom_call.1} parent=5 // pred_check_branch
        %129 = sbr.rel (%p127) target = $region16
      $region15: #{tpu_custom_call.1} parent=5 // pred_region
        // Predicated region
        $region17: #{tpu_custom_call.1} parent=15 // pred_check
          %p130 = pneg %p51
        $region18: #{tpu_custom_call.1} parent=15 // pred_check_branch
          %132 = sbr.rel (%p130) target = $region20
        $region19: #{tpu_custom_call.1} parent=15 // pred_region
          %s133 = sand.u32 %s41, 1
          %s134 = scalar_lea.sflag [#allocation3], %s133
          %s135 = sand.u32 %s41, 1
          %s136 = smul.addr %s135, 6
          %s137 = scalar_lea.vmem [#allocation2], %s136
          %s138 = smul.u32 3, %s25
          %s140 = ssub.s32 96, 96
          %141 = vsyncadd %s134, %s140
          %s142 = smul.addr %s24, 6
          %s143 = sadd.s32 %s138, %s142
          %s144 = smul.addr %s143, 32
          %s145 = scalar_lea.hbm %s0, %s144
          %s147 = sshll.u32 %s137, 4
          %s148 = int_to_ptr.vmem [resolvable:$true] %s147
          %150 = dma.hbm_to_vmem [thread:$0]  %s145, 96, %s148, %s134
        $region20: #{tpu_custom_call.1} parent=15 // pred_fallthru
          _
        // Predicated region
        $region21: #{tpu_custom_call.1} parent=15 // pred_check
          %p151 = pneg %p77
        $region22: #{tpu_custom_call.1} parent=15 // pred_check_branch
          %153 = sbr.rel (%p151) target = $region24
        $region23: #{tpu_custom_call.1} parent=15 // pred_region
          %s154 = sand.u32 %s67, 1
          %s155 = scalar_lea.sflag [#allocation6], %s154
          %s156 = sand.u32 %s67, 1
          %s157 = smul.addr %s156, 6
          %s158 = scalar_lea.vmem [#allocation5], %s157
          %s159 = smul.u32 3, %s25
          %s161 = ssub.s32 96, 96
          %162 = vsyncadd %s155, %s161
          %s163 = smul.addr %s159, 32
          %s164 = scalar_lea.hbm %s1, %s163
          %s166 = sshll.u32 %s158, 4
          %s167 = int_to_ptr.vmem [resolvable:$true] %s166
          %169 = dma.hbm_to_vmem [thread:$0]  %s164, 96, %s167, %s155
        $region24: #{tpu_custom_call.1} parent=15 // pred_fallthru
          _
      $region16: #{tpu_custom_call.1} parent=5 // pred_fallthru
        _
      %p170 = scmp.le.s32.totalorder 1, %s17
      %p171 = scmp.lt.s32.totalorder %s17, 3
      %p172 = pnand %p170, %p171
      %p173 = pneg %p172
      // Predicated region
      $region25: #{tpu_custom_call.1} parent=5 // pred_check
        _
      $region26: #{tpu_custom_call.1} parent=5 // pred_check_branch
        %175 = sbr.rel (%p172) target = $region28
      $region27: #{tpu_custom_call.1} parent=5 // pred_region
        %s176 = ssub.s32 %s17, 1
        %s177 = sand.u32 %s44, 1
        %s178 = scalar_lea.sflag [#allocation3], %s177
        %s179 = sand.u32 %s44, 1
        %s180 = smul.addr %s179, 6
        %s181 = scalar_lea.vmem [#allocation2], %s180
        // Predicated region
        $region29: #{tpu_custom_call.1} parent=27 // pred_check
          %p182 = pneg %p57
        $region30: #{tpu_custom_call.1} parent=27 // pred_check_branch
          %184 = sbr.rel (%p182) target = $region32
        $region31: #{tpu_custom_call.1} parent=27 // pred_region
          %185 = dma.done %s178, 96
        $region32: #{tpu_custom_call.1} parent=27 // pred_fallthru
          _
        %s186 = sand.u32 %s70, 1
        %s187 = scalar_lea.sflag [#allocation6], %s186
        %s188 = sand.u32 %s70, 1
        %s189 = smul.addr %s188, 6
        %s190 = scalar_lea.vmem [#allocation5], %s189
        // Predicated region
        $region33: #{tpu_custom_call.1} parent=27 // pred_check
          %p191 = pneg %p83
        $region34: #{tpu_custom_call.1} parent=27 // pred_check_branch
          %193 = sbr.rel (%p191) target = $region36
        $region35: #{tpu_custom_call.1} parent=27 // pred_region
          %194 = dma.done %s187, 96
        $region36: #{tpu_custom_call.1} parent=27 // pred_fallthru
          _
        %s195 = sand.u32 %s44, 1
        %s196 = scalar_lea.sflag [#allocation3], %s195
        %s197 = sand.u32 %s44, 1
        %s198 = smul.addr %s197, 6
        %s199 = scalar_lea.vmem [#allocation2], %s198
        %p200 = pneg %p57
        %p201 = pneg %p54
        %s202 = sand.u32 %s70, 1
        %s203 = scalar_lea.sflag [#allocation6], %s202
        %s204 = sand.u32 %s70, 1
        %s205 = smul.addr %s204, 6
        %s206 = scalar_lea.vmem [#allocation5], %s205
        %p207 = pneg %p83
        %p208 = pneg %p80
        %p209 = pneg %p111
        %p210 = pneg %p108
        %s211 = sand.u32 %s98, 1
        %s212 = scalar_lea.sflag [#allocation4], %s211
        %s213 = sand.u32 %s98, 1
        %s214 = smul.addr %s213, 6
        %s215 = scalar_lea.vmem [#allocation7], %s214
        %s216 = smul.u32 3, %s27
        %s217 = smul.u32 3, %s27
        %s218 = smul.u32 3, %s27
        %v219 = vld [vmem:[%s190] ss:$2 sm:$0x7]
        %s220 = scalar_lea.vmem %s190, 1 [#allocation5]
        %v221 = vld [vmem:[%s220] ss:$2 sm:$0x7]
        %v222 = vld [vmem:[%s181] sm:$0x3f]
        %v224 = vlaneseq
        %v225 = vshrl.u32 %v224, 7
        %v226 = vsub.s32 0, %v225
        %v227 = vrot.slane %v219, %v226
        %v228 = vlaneseq
        %v229 = vshrl.u32 %v228, 7
        %v230 = vsub.s32 1, %v229
        %v231 = vrot.slane %v219, %v230
        %v232 = vlaneseq
        %v233 = vshrl.u32 %v232, 7
        %v234 = vsub.s32 2, %v233
        %v235 = vrot.slane %v219, %v234
        %v236 = vcombine.low %v227, %v231
        %v238 = vunpack.c.l.s4 1983009808
        %v239 = vunpack.c.0.s8 %v238
        %v240 = vlaneseq
        %v241 = vshrl.u32 %v240, 7
        %v242 = vsub.s32 %v239, %v241
        %v243 = vrot.slane %v236, %v242
        %v245 = vunpack.c.l.s4 1983009808
        %v246 = vunpack.c.0.s8 %v245
        %v247 = vlaneseq
        %v248 = vshrl.u32 %v247, 7
        %v249 = vsub.s32 %v246, %v248
        %v250 = vrot.slane %v235, %v249
        %v251 = vcombine.low %v243, %v250
        %v253 = vmul.f32 %v222, %v251
        %v255 = vlaneseq
        %v256 = vshrl.u32 %v255, 7
        %v257 = vsub.s32 0, %v256
        %v258 = vrot.slane %v221, %v257
        %v259 = vlaneseq
        %v260 = vshrl.u32 %v259, 7
        %v261 = vsub.s32 1, %v260
        %v262 = vrot.slane %v221, %v261
        %v263 = vlaneseq
        %v264 = vshrl.u32 %v263, 7
        %v265 = vsub.s32 2, %v264
        %v266 = vrot.slane %v221, %v265
        %v267 = vcombine.low %v258, %v262
        %v269 = vunpack.c.l.s4 1983009808
        %v270 = vunpack.c.0.s8 %v269
        %v271 = vlaneseq
        %v272 = vshrl.u32 %v271, 7
        %v273 = vsub.s32 %v270, %v272
        %v274 = vrot.slane %v267, %v273
        %v276 = vunpack.c.l.s4 1983009808
        %v277 = vunpack.c.0.s8 %v276
        %v278 = vlaneseq
        %v279 = vshrl.u32 %v278, 7
        %v280 = vsub.s32 %v277, %v279
        %v281 = vrot.slane %v266, %v280
        %v282 = vcombine.low %v274, %v281
        %v284 = vadd.f32 %v253, %v282
        %285 = vst [vmem:[%s215] sm:$0x3f] %v284
        %s286 = sand.u32 %s98, 1
        %s287 = scalar_lea.sflag [#allocation4], %s286
        %s288 = sand.u32 %s98, 1
        %s289 = smul.addr %s288, 6
        %s290 = scalar_lea.vmem [#allocation7], %s289
        // Predicated region
        $region37: #{tpu_custom_call.1} parent=27 // pred_check
          %p291 = pneg %p108
        $region38: #{tpu_custom_call.1} parent=27 // pred_check_branch
          %293 = sbr.rel (%p291) target = $region40
        $region39: #{tpu_custom_call.1} parent=27 // pred_region
          %s294 = smul.u32 3, %s27
          %s296 = ssub.s32 96, 96
          %297 = vsyncadd %s287, %s296
          %s298 = smul.addr %s26, 6
          %s299 = sadd.s32 %s294, %s298
          %s300 = smul.addr %s299, 32
          %s301 = scalar_lea.hbm %s2, %s300
          %s303 = sshll.u32 %s290, 4
          %s304 = int_to_ptr.vmem [resolvable:$true] %s303
          %306 = dma.vmem_to_hbm [thread:$0]  %s304, 96, %s301, %s287
        $region40: #{tpu_custom_call.1} parent=27 // pred_fallthru
          _
      $region28: #{tpu_custom_call.1} parent=5 // pred_fallthru
        _
      %p307 = scmp.le.s32.totalorder 2, %s17
      // Predicated region
      $region41: #{tpu_custom_call.1} parent=5 // pred_check
        %p308 = pneg %p307
      $region42: #{tpu_custom_call.1} parent=5 // pred_check_branch
        %310 = sbr.rel (%p308) target = $region44
      $region43: #{tpu_custom_call.1} parent=5 // pred_region
        %s311 = ssub.s32 %s17, 2
        // Predicated region
        $region45: #{tpu_custom_call.1} parent=43 // pred_check
          %p312 = pneg %p114
        $region46: #{tpu_custom_call.1} parent=43 // pred_check_branch
          %314 = sbr.rel (%p312) target = $region48
        $region47: #{tpu_custom_call.1} parent=43 // pred_region
          %s315 = sand.u32 %s99, 1
          %s316 = scalar_lea.sflag [#allocation4], %s315
          %s317 = sand.u32 %s99, 1
          %s318 = smul.addr %s317, 6
          %s319 = scalar_lea.vmem [#allocation7], %s318
          %320 = dma.done %s316, 96
        $region48: #{tpu_custom_call.1} parent=43 // pred_fallthru
          _
      $region44: #{tpu_custom_call.1} parent=5 // pred_fallthru
        _
    $region6: #{tpu_custom_call.1} parent=1 // loop_footer
      %s21 = sadd.s32 1, %s17
    $region7: #{tpu_custom_call.1} parent=1 // loop_footer_branch
      %16 = sbr.rel target = $region3
    $region8: #{tpu_custom_call.1} parent=1 // loop_exit
      _
    %321 = vsyncpa [#allocation3], 1
    %s322 = scalar_lea.sflag [#allocation3], 1
    %323 = vsyncpa %s322, 1
    %324 = vsyncpa [#allocation6], 1
    %s325 = scalar_lea.sflag [#allocation6], 1
    %326 = vsyncpa %s325, 1
    %327 = vsyncpa [#allocation4], 1
    %s328 = scalar_lea.sflag [#allocation4], 1
    %329 = vsyncpa %s328, 1

</llo_original>
